<compile_context>
chip_gen: v5e
topology: v5e:2x2
jax: 0.10.0
libtpu: 0.0.40
codegen_flags: <defaults>
</compile_context>

<pallas_src>
import functools

import jax
import jax.numpy as jnp
from jax.experimental import pallas as pl
from jax.experimental.pallas import tpu as pltpu

_MIB = 1024 * 1024
_LANES = 128


def _layernorm_kernel(x_ref, g_ref, b_ref, o_ref, *, eps):
    # x_ref: (block_rows, D)   g_ref/b_ref: (1, D) f32   o_ref: (block_rows, D)
    #
    # Two reduction passes, numerically identical to the PyTorch reference
    # (mean, then mean of centered squares), structured so the pass-1 f32 copy
    # is not kept live across the normalization pass: x_ref is re-read, which
    # lets Mosaic reuse its buffer and keeps the peak live f32 set to ~2 tiles.
    u = jnp.mean(x_ref[...].astype(jnp.float32), axis=-1, keepdims=True)
    xc = x_ref[...].astype(jnp.float32) - u
    s = jnp.mean(xc * xc, axis=-1, keepdims=True)        # biased variance
    inv = jax.lax.rsqrt(s + eps)                         # EUP; eps inside sqrt
    o_ref[...] = (xc * inv * g_ref[...] + b_ref[...]).astype(o_ref.dtype)


def _vmem_plan():
    """Return (tile_budget_bytes, vmem_limit_bytes, min_grid_steps)."""
    try:
        kind = jax.devices()[0].device_kind.lower()
    except Exception:  # pragma: no cover - be robust to odd runtimes
        kind = ""
    if "v7" in kind:
        # v7x: 64 MiB VMEM per TensorCore.  Keep double-buffered tiles plus
        # the in-kernel f32 working set well under ~40 MiB, leaving headroom
        # for Mosaic internal scratch; require >= 2 grid steps so the
        # "parallel" row axis shards across the 2 TensorCores.
        return 16 * _MIB, 44 * _MIB, 2
    # v5e / v5p / v6e: 128 MiB physical VMEM.  Raise the scoped limit above
    # the 16/32 MiB default, but 256-512-row tiles already sit at ~85% of the
    # HBM roofline, so no need for a huge budget (v5e's slower HBM amortizes
    # the per-step overhead even sooner).
    return 24 * _MIB, 64 * _MIB, 1


def _sublane(in_bytes):
    # Sublane packing: f32 -> 8 rows per vreg, bf16 -> 16, int8/fp8 -> 32.
    return max(8, 32 // max(in_bytes, 1))


def _pick_block_rows(rows, D, in_bytes, out_bytes, tile_budget_bytes,
                     min_grid_steps):
    sub = _sublane(in_bytes)
    # Resident VMEM per row: double-buffered input + output tiles plus ~3
    # full-tile f32 working copies inside the kernel body (conservative bound
    # on the f32-cast / centered / scaled intermediates).  gamma/beta are tiny.
    per_row = D * (2 * in_bytes + 2 * out_bytes + 12)
    br = max(sub, tile_budget_bytes // max(per_row, 1))
    br = (br // sub) * sub
    rows_rounded = pl.cdiv(rows, sub) * sub
    # Cap at 512 rows: per-grid-step overhead (~0.35us) is already <~6% of a
    # 512-row tile's HBM time; larger tiles only add VMEM / spill risk.
    br = min(br, rows_rounded, 512)
    # Guarantee at least `min_grid_steps` grid steps (v7x: 2) so the parallel
    # row axis can shard across TensorCores instead of idling one.
    if min_grid_steps > 1 and rows_rounded > sub:
        max_per_step = pl.cdiv(pl.cdiv(rows, min_grid_steps), sub) * sub
        br = min(br, max_per_step)
    return max(br, sub)


def _reference(x, gamma, beta, eps):
    u = jnp.mean(x, axis=-1, keepdims=True)
    s = jnp.mean((x - u) ** 2, axis=-1, keepdims=True)
    return gamma * ((x - u) / jnp.sqrt(s + eps)) + beta


def layernorm(x, gamma, beta, *, eps=1e-12, block_rows=None):
    """TF-style LayerNorm over the last axis of x."""
    orig_shape = x.shape
    D = orig_shape[-1]
    rows = 1
    for d in orig_shape[:-1]:
        rows *= d

    if D < _LANES:
        # Tiny hidden sizes would force masked vst.msk stores at a fraction of
        # lane width; plain XLA is simpler and faster there.  Compute in f32
        # to match the kernel's numerics, then cast back.
        # TODO(synk): alternatively pack 128//D rows per lane row with an
        # in-lane segmented reduction to keep tiny widths on the Pallas path.
        out = _reference(x.astype(jnp.float32), gamma.astype(jnp.float32),
                         beta.astype(jnp.float32), eps)
        return out.astype(x.dtype)

    x2 = x.reshape(rows, D)
    # Cast the (tiny) affine params to f32 once here, not per grid step.
    g2 = gamma.astype(jnp.float32).reshape(1, D)
    b2 = beta.astype(jnp.float32).reshape(1, D)

    in_bytes = jnp.dtype(x.dtype).itemsize
    out_bytes = in_bytes
    sub = _sublane(in_bytes)
    tile_budget, vmem_limit, min_steps = _vmem_plan()
    if block_rows is None:
        block_rows = _pick_block_rows(rows, D, in_bytes, out_bytes,
                                      tile_budget, min_steps)
    else:
        # Round caller-supplied tile heights up to the dtype's sublane packing
        # (e.g. bf16 needs multiples of 16) so the block shape is a legal tile.
        block_rows = pl.cdiv(max(int(block_rows), 1), sub) * sub
        block_rows = min(block_rows, pl.cdiv(rows, sub) * sub)

    # No host-side row padding: Pallas bounds-clips the final partial block.
    # Clipped tail rows are normalized independently (no reduction crosses
    # rows) and their stores are masked, so garbage never reaches the output.
    grid = (pl.cdiv(rows, block_rows),)

    out = pl.pallas_call(
        functools.partial(_layernorm_kernel, eps=eps),
        out_shape=jax.ShapeDtypeStruct((rows, D), x.dtype),
        grid_spec=pltpu.PrefetchScalarGridSpec(
            num_scalar_prefetch=0,
            grid=grid,
            in_specs=[
                # TODO(synk): if profiles show exposed per-step DMA issue
                # latency at these tile sizes, add pipeline_mode=pl.Buffered(3)
                # on this spec rather than re-growing block_rows.
                pl.BlockSpec((block_rows, D), lambda i: (i, 0)),
                pl.BlockSpec((1, D), lambda i: (0, 0)),
                pl.BlockSpec((1, D), lambda i: (0, 0)),
            ],
            out_specs=pl.BlockSpec((block_rows, D), lambda i: (i, 0)),
        ),
        compiler_params=pltpu.CompilerParams(
            dimension_semantics=("parallel",),
            vmem_limit_bytes=vmem_limit,
        ),
    )(x2, g2, b2)

    return out.reshape(orig_shape)


if __name__ == "__main__":
    eps = 1e-12
    key = jax.random.PRNGKey(0)
    k0, k1, k2, k3, k4 = jax.random.split(key, 5)

    # 1) Primary Pallas path: lane-dense hidden (multiple of 128), module-init
    #    params (gamma=1, beta=0), f32.
    batch, seq, hidden = 2, 8, 128
    x = jax.random.normal(k0, (batch, seq, hidden), dtype=jnp.float32)
    gamma = jnp.ones((hidden,), dtype=jnp.float32)
    beta = jnp.zeros((hidden,), dtype=jnp.float32)
    y = jax.block_until_ready(layernorm(x, gamma, beta, eps=eps))
    ref = _reference(x, gamma, beta, eps)
    assert jnp.allclose(y, ref, atol=1e-5, rtol=1e-5), "mismatch (f32, D=128)"

    # 2) Tail-block clipping + non-trivial affine params: rows (3*5=15) not a
    #    multiple of block_rows=8 -> exercises Pallas bounds-clipping.
    hidden2 = 256
    x2 = jax.random.normal(k1, (3, 5, hidden2), dtype=jnp.float32)
    g2 = 1.0 + 0.1 * jax.random.normal(k2, (hidden2,), dtype=jnp.float32)
    b2 = 0.1 * jax.random.normal(k3, (hidden2,), dtype=jnp.float32)
    y2 = jax.block_until_ready(layernorm(x2, g2, b2, eps=eps, block_rows=8))
    ref2 = _reference(x2, g2, b2, eps)
    assert jnp.allclose(y2, ref2, atol=1e-5, rtol=1e-5), "mismatch (tail block)"

    # 3) bf16 input (exercises sublane-packing rounding of block_rows).
    x3 = jax.random.normal(k4, (4, 16, hidden2), dtype=jnp.bfloat16)
    y3 = jax.block_until_ready(layernorm(x3, g2, b2, eps=eps))
    ref3 = _reference(x3.astype(jnp.float32), g2, b2, eps)
    assert jnp.allclose(y3.astype(jnp.float32), ref3, atol=3e-2, rtol=3e-2), \
        "mismatch (bf16)"

    # 4) Tiny hidden (cfg.dim=32) -> documented XLA fallback path.
    x4 = jax.random.normal(k0, (2, 8, 32), dtype=jnp.float32)
    g4 = jnp.ones((32,), dtype=jnp.float32)
    b4 = jnp.zeros((32,), dtype=jnp.float32)
    y4 = jax.block_until_ready(layernorm(x4, g4, b4, eps=eps))
    ref4 = _reference(x4, g4, b4, eps)
    assert jnp.allclose(y4, ref4, atol=1e-5, rtol=1e-5), "mismatch (D<128 path)"

    print("KERNEL_OK")
</pallas_src>

<mosaic_0001>
module attributes {stable_mosaic.version = 11 : i64} {
  func.func @_layernorm_kernel(%arg0: i32, %arg1: memref<16x128xf32, #tpu.memory_space<vmem>>, %arg2: memref<1x128xf32, #tpu.memory_space<vmem>>, %arg3: memref<1x128xf32, #tpu.memory_space<vmem>>, %arg4: memref<16x128xf32, #tpu.memory_space<vmem>>) attributes {dimension_semantics = [#tpu.dimension_semantics<parallel>], iteration_bounds = array<i64: 1>, scalar_prefetch = 0 : i64, scratch_operands = 0 : i64, tpu.core_type = #tpu.core_type<tc>, window_params = [{transform_indices = @transform_0, window_bounds = array<i64: 16, 128>}, {pipeline_mode = #tpu.pipeline_mode<synchronous>, transform_indices = @transform_1, window_bounds = array<i64: 1, 128>}, {pipeline_mode = #tpu.pipeline_mode<synchronous>, transform_indices = @transform_2, window_bounds = array<i64: 1, 128>}, {transform_indices = @transform_3, window_bounds = array<i64: 16, 128>}]} {
    %c0 = arith.constant 0 : index
    %c0_0 = arith.constant 0 : index
    %0 = vector.load %arg1[%c0, %c0_0] : memref<16x128xf32, #tpu.memory_space<vmem>>, vector<16x128xf32>
    %cst = arith.constant dense<0.000000e+00> : vector<16xf32>
    %1 = vector.multi_reduction <add>, %0, %cst [1] : vector<16x128xf32> to vector<16xf32>
    %2 = vector.shape_cast %1 : vector<16xf32> to vector<16x1xf32>
    %cst_1 = arith.constant 1.280000e+02 : f32
    %3 = vector.broadcast %cst_1 : f32 to vector<16x1xf32>
    %4 = arith.divf %2, %3 : vector<16x1xf32>
    %c0_2 = arith.constant 0 : index
    %c0_3 = arith.constant 0 : index
    %5 = vector.load %arg1[%c0_2, %c0_3] : memref<16x128xf32, #tpu.memory_space<vmem>>, vector<16x128xf32>
    %6 = vector.broadcast %4 : vector<16x1xf32> to vector<16x128xf32>
    %7 = arith.subf %5, %6 : vector<16x128xf32>
    %8 = arith.mulf %7, %7 : vector<16x128xf32>
    %cst_4 = arith.constant dense<0.000000e+00> : vector<16xf32>
    %9 = vector.multi_reduction <add>, %8, %cst_4 [1] : vector<16x128xf32> to vector<16xf32>
    %10 = vector.shape_cast %9 : vector<16xf32> to vector<16x1xf32>
    %cst_5 = arith.constant 1.280000e+02 : f32
    %11 = vector.broadcast %cst_5 : f32 to vector<16x1xf32>
    %12 = arith.divf %10, %11 : vector<16x1xf32>
    %cst_6 = arith.constant 9.99999996E-13 : f32
    %13 = vector.broadcast %cst_6 : f32 to vector<16x1xf32>
    %14 = arith.addf %12, %13 : vector<16x1xf32>
    %15 = math.rsqrt %14 : vector<16x1xf32>
    %16 = vector.broadcast %15 : vector<16x1xf32> to vector<16x128xf32>
    %17 = arith.mulf %7, %16 : vector<16x128xf32>
    %c0_7 = arith.constant 0 : index
    %c0_8 = arith.constant 0 : index
    %18 = vector.load %arg2[%c0_7, %c0_8] : memref<1x128xf32, #tpu.memory_space<vmem>>, vector<1x128xf32>
    %19 = vector.broadcast %18 : vector<1x128xf32> to vector<16x128xf32>
    %20 = arith.mulf %17, %19 : vector<16x128xf32>
    %c0_9 = arith.constant 0 : index
    %c0_10 = arith.constant 0 : index
    %21 = vector.load %arg3[%c0_9, %c0_10] : memref<1x128xf32, #tpu.memory_space<vmem>>, vector<1x128xf32>
    %22 = vector.broadcast %21 : vector<1x128xf32> to vector<16x128xf32>
    %23 = arith.addf %20, %22 : vector<16x128xf32>
    %c0_11 = arith.constant 0 : index
    %c0_12 = arith.constant 0 : index
    %24 = vector.load %arg4[%c0_11, %c0_12] : memref<16x128xf32, #tpu.memory_space<vmem>>, vector<16x128xf32>
    tpu.vector_store %arg4[%c0_11, %c0_12], %23 {strides = array<i32>} : memref<16x128xf32, #tpu.memory_space<vmem>>, vector<16x128xf32>,
    return
  }
  func.func @transform_0(%arg0: i32) -> (i32, i32) {
    %c0_i32 = arith.constant 0 : i32
    %c0_i32_0 = arith.constant 0 : i32
    return %arg0, %c0_i32 : i32, i32
  }
  func.func @transform_1(%arg0: i32) -> (i32, i32) {
    %c0_i32 = arith.constant 0 : i32
    %c0_i32_0 = arith.constant 0 : i32
    %c0_i32_1 = arith.constant 0 : i32
    return %c0_i32, %c0_i32_0 : i32, i32
  }
  func.func @transform_2(%arg0: i32) -> (i32, i32) {
    %c0_i32 = arith.constant 0 : i32
    %c0_i32_0 = arith.constant 0 : i32
    %c0_i32_1 = arith.constant 0 : i32
    return %c0_i32, %c0_i32_0 : i32, i32
  }
  func.func @transform_3(%arg0: i32) -> (i32, i32) {
    %c0_i32 = arith.constant 0 : i32
    %c0_i32_0 = arith.constant 0 : i32
    return %arg0, %c0_i32 : i32, i32
  }
}

</mosaic_0001>

<llo_original>
// kernel: tpu_custom_call.1
$region0: #{tpu_custom_call.1}
  #allocation0 [shape = 'u32[]', space=smem, size = 0x4, offset = 0x4, fixed_abs, tag = 'smem constant byte address 0x4 - core index']
  #allocation1 [shape = 'u32[72,128]{1,0:T(1,128)}', space=vmem, size = 0x9000, scoped, tag = 'internal scratch']
  %s0 = inlined_call_operand.hbm [shape: f32[16,128], index: 0, kind: input, shape index: {}]
  %s1 = inlined_call_operand.hbm [shape: f32[1,128], index: 1, kind: input, shape index: {}]
  %s2 = inlined_call_operand.vmem [shape: f32[1,128], index: 2, kind: input, shape index: {}]
  %s3 = inlined_call_operand.hbm [shape: f32[16,128], index: 3, kind: output, shape index: {}]
  %s4 = sld [smem:[#allocation0]]
  $region30: #{tpu_custom_call.1} parent=0
    _
  %s6 = ssub.s32 1, %s4
  %s7 = scalar_select 0, %s6, %s4
  $region1: #{tpu_custom_call.1} parent=0
    #allocation2 [shape = 'u8[8192]{0}', space=vmem, size = 0x2000, scoped, tag = 'input window, operand 0, single buffered']
    #allocation3 [shape = 's32[1]{0}', space=sflag, size = 0x4, scoped, tag = 'scoped memory for tpu_custom_call.1']
    #allocation4 [shape = 's32[1]{0}', space=sflag, size = 0x4, scoped, tag = 'scoped memory for tpu_custom_call.1']
    #allocation5 [shape = 'u8[512]{0}', space=vmem, size = 0x400, scoped, tag = 'input window, operand 1, single buffered']
    #allocation6 [shape = 's32[1]{0}', space=sflag, size = 0x4, scoped, tag = 'scoped memory for tpu_custom_call.1']
    #allocation7 [shape = 'u8[8192]{0}', space=vmem, size = 0x2000, scoped, tag = 'output window, operand 0, single buffered']
    %8 = vsyncpa [#allocation3], 0
    %9 = vsyncpa [#allocation6], 0
    %10 = vsyncpa [#allocation4], 0
    // Predicated region
    $region2: #{tpu_custom_call.1} parent=1 // pred_check
      _
    $region3: #{tpu_custom_call.1} parent=1 // pred_check_branch
      %12 = sbr.rel (0) target = $region5
    $region4: #{tpu_custom_call.1} parent=1 // pred_region
      %14 = vsyncadd [#allocation3], 0
      %s15 = sshll.u32 %s0, 4
      %s16 = int_to_ptr.hbm [resolvable:$true] %s15
      %s17 = sshll.u32 [#allocation2], 4
      %s18 = int_to_ptr.vmem [resolvable:$true] %s17
      %23 = dma.hbm_to_vmem [thread:$0]  %s16, 256, %s18, [#allocation3], 128, 128, 8
    $region5: #{tpu_custom_call.1} parent=1 // pred_fallthru
      _
    // Predicated region
    $region6: #{tpu_custom_call.1} parent=1 // pred_check
      _
    $region7: #{tpu_custom_call.1} parent=1 // pred_check_branch
      %25 = sbr.rel (0) target = $region9
    $region8: #{tpu_custom_call.1} parent=1 // pred_region
      %27 = vsyncadd [#allocation6], 0
      %s29 = sshll.u32 %s1, 4
      %s30 = int_to_ptr.hbm [resolvable:$true] %s29
      %s31 = sshll.u32 [#allocation5], 4
      %s32 = int_to_ptr.vmem [resolvable:$true] %s31
      %34 = dma.hbm_to_vmem [thread:$0]  %s30, 16, %s32, [#allocation6]
    $region9: #{tpu_custom_call.1} parent=1 // pred_fallthru
      _
    // Predicated region
    $region10: #{tpu_custom_call.1} parent=1 // pred_check
      _
    $region11: #{tpu_custom_call.1} parent=1 // pred_check_branch
      %36 = sbr.rel (0) target = $region13
    $region12: #{tpu_custom_call.1} parent=1 // pred_region
      _
    $region13: #{tpu_custom_call.1} parent=1 // pred_fallthru
      _
    // Predicated region
    $region14: #{tpu_custom_call.1} parent=1 // pred_check
      _
    $region15: #{tpu_custom_call.1} parent=1 // pred_check_branch
      %38 = sbr.rel (0) target = $region17
    $region16: #{tpu_custom_call.1} parent=1 // pred_region
      %40 = dma.done [#allocation3], 256
    $region17: #{tpu_custom_call.1} parent=1 // pred_fallthru
      _
    // Predicated region
    $region18: #{tpu_custom_call.1} parent=1 // pred_check
      _
    $region19: #{tpu_custom_call.1} parent=1 // pred_check_branch
      %42 = sbr.rel (0) target = $region21
    $region20: #{tpu_custom_call.1} parent=1 // pred_region
      %44 = dma.done [#allocation6], 16
    $region21: #{tpu_custom_call.1} parent=1 // pred_fallthru
      _
    %v45 = vld [vmem:[#allocation2] sm:$0xff]
    %v46 = vld [vmem:[#allocation2 + $0x8] sm:$0xff]
    %47 = vadd.xlane.f32.xlu0 %v45
    %v48 = vpop.xlane.xlu0 %47
    %49 = vadd.xlane.f32.xlu0 %v46
    %v50 = vpop.xlane.xlu0 %49
    %v51 = vrcp.pop 128.0
    %v52 = vmul.f32 128.0, %v51
    %v53 = vsub.f32 1.0, %v52
    %v54 = vmul.f32 %v51, %v53
    %v55 = vadd.f32 %v51, %v54
    %vm56 = vweird.f32 %v51
    %v57 = vsel %vm56, %v51, %v55
    %v58 = vmul.f32 %v48, %v57
    %v59 = vmul.f32 %v50, %v57
    %v60 = vsub.f32 %v45, %v58
    %v61 = vsub.f32 %v46, %v59
    %v62 = vmul.f32 %v60, %v60
    %v63 = vmul.f32 %v61, %v61
    %64 = vadd.xlane.f32.xlu0 %v62
    %v65 = vpop.xlane.xlu0 %64
    %66 = vadd.xlane.f32.xlu0 %v63
    %v67 = vpop.xlane.xlu0 %66
    %v68 = vmul.f32 %v65, %v57
    %v69 = vmul.f32 %v67, %v57
    %v70 = vadd.f32 %v68, 1e-12
    %v71 = vadd.f32 %v69, 1e-12
    %v72 = vrsqrt.pop %v70
    %v73 = vmul.f32 %v72, %v70
    %v74 = vmul.f32 %v73, %v72
    %v75 = vmul.f32 0.5, %v74
    %v76 = vsub.f32 1.5, %v75
    %v77 = vmul.f32 %v72, %v76
    %vm78 = vweird.f32 %v70
    %vm79 = vweird.f32 %v72
    %vm80 = vmor %vm78, %vm79
    %v81 = vsel %vm80, %v72, %v77
    %v82 = vrsqrt.pop %v71
    %v83 = vmul.f32 %v82, %v71
    %v84 = vmul.f32 %v83, %v82
    %v85 = vmul.f32 0.5, %v84
    %v86 = vsub.f32 1.5, %v85
    %v87 = vmul.f32 %v82, %v86
    %vm88 = vweird.f32 %v71
    %vm89 = vweird.f32 %v82
    %vm90 = vmor %vm88, %vm89
    %v91 = vsel %vm90, %v82, %v87
    %v92 = vmul.f32 %v60, %v81
    %v93 = vmul.f32 %v61, %v91
    %v94 = vld [vmem:[#allocation5] sm:$0x1]
    %v96 = vperm.slane %v94, 0
    %v98 = vmul.f32 %v92, %v96
    %v99 = vmul.f32 %v93, %v96
    %v100 = vld [vmem:[%s2] sm:$0x1]
    %v102 = vperm.slane %v100, 0
    %v104 = vadd.f32 %v98, %v102
    %v105 = vadd.f32 %v99, %v102
    %106 = vst [vmem:[#allocation7] sm:$0xff] %v104
    %107 = vst [vmem:[#allocation7 + $0x8] sm:$0xff] %v105
    // Predicated region
    $region22: #{tpu_custom_call.1} parent=1 // pred_check
      _
    $region23: #{tpu_custom_call.1} parent=1 // pred_check_branch
      %109 = sbr.rel (0) target = $region25
    $region24: #{tpu_custom_call.1} parent=1 // pred_region
      %111 = vsyncadd [#allocation4], 0
      %s112 = sshll.u32 [#allocation7], 4
      %s113 = int_to_ptr.vmem [resolvable:$true] %s112
      %s114 = sshll.u32 %s3, 4
      %s115 = int_to_ptr.hbm [resolvable:$true] %s114
      %120 = dma.vmem_to_hbm [thread:$0]  %s113, 256, %s115, [#allocation4], 128, 128, 8
    $region25: #{tpu_custom_call.1} parent=1 // pred_fallthru
      _
    // Predicated region
    $region26: #{tpu_custom_call.1} parent=1 // pred_check
      _
    $region27: #{tpu_custom_call.1} parent=1 // pred_check_branch
      %122 = sbr.rel (0) target = $region29
    $region28: #{tpu_custom_call.1} parent=1 // pred_region
      %124 = dma.done [#allocation4], 256
    $region29: #{tpu_custom_call.1} parent=1 // pred_fallthru
      _
    %125 = vsyncpa [#allocation3], 1
    %126 = vsyncpa [#allocation6], 1
    %127 = vsyncpa [#allocation4], 1

</llo_original>
